<compile_context>
chip_gen: v7x
topology: tpu7x:2x2x1
jax: 0.10.0
libtpu: 0.0.40
codegen_flags: <defaults>
</compile_context>

<pallas_src>
import functools

import jax
import jax.numpy as jnp
import numpy as np
from jax.experimental import pallas as pl
from jax.experimental.pallas import tpu as pltpu

_LANES = 128
_GRAY_R, _GRAY_G, _GRAY_B = 0.2989, 0.587, 0.114  # torchvision grayscale weights


# ---------------------------------------------------------------------------
# Per-channel color ops on (r, g, b) tuples of same-shaped arrays.  Shared by
# the Pallas kernel (on (R,128) tiles), the contrast-mean pre-pass and the
# pure-JAX reference.
# ---------------------------------------------------------------------------
def _gray3(r, g, b):
    return _GRAY_R * r + _GRAY_G * g + _GRAY_B * b


def _brightness3(r, g, b, f):
    # torchvision: _blend(img, zeros, f) then clamp to [0,1] for float images
    return (jnp.clip(r * f, 0.0, 1.0),
            jnp.clip(g * f, 0.0, 1.0),
            jnp.clip(b * f, 0.0, 1.0))


def _contrast3(r, g, b, f, mean):
    m = (1.0 - f) * mean
    return (jnp.clip(f * r + m, 0.0, 1.0),
            jnp.clip(f * g + m, 0.0, 1.0),
            jnp.clip(f * b + m, 0.0, 1.0))


def _saturation3(r, g, b, f):
    gray = (1.0 - f) * _gray3(r, g, b)
    return (jnp.clip(f * r + gray, 0.0, 1.0),
            jnp.clip(f * g + gray, 0.0, 1.0),
            jnp.clip(f * b + gray, 0.0, 1.0))


def _hue3(r, g, b, hf):
    # torchvision _rgb2hsv -> hue shift (mod 1) -> _hsv2rgb, branchless form.
    maxc = jnp.maximum(jnp.maximum(r, g), b)
    minc = jnp.minimum(jnp.minimum(r, g), b)
    cr = maxc - minc
    eqc = cr == 0.0
    ones = jnp.ones_like(maxc)
    # 2 exact divides (EUP); approx reciprocal would risk the 1e-5 tolerance.
    inv_cr = 1.0 / jnp.where(eqc, ones, cr)
    s = cr * (1.0 / jnp.where(eqc, ones, maxc))
    rc = (maxc - r) * inv_cr
    gc = (maxc - g) * inv_cr
    bc = (maxc - b) * inv_cr
    is_r = maxc == r
    is_g = (maxc == g) & (~is_r)
    # Nested selects instead of 3 bool->float casts + muls + adds.
    h = jnp.where(is_r, bc - gc,
                  jnp.where(is_g, 2.0 + rc - bc, 4.0 + gc - rc))
    # Fused: mod(mod(h/6 + 1, 1) + hf, 1) == mod(h/6 + 1 + hf, 1); the operand
    # is always >= 0 so t - floor(t) is the floor-mod torchvision uses.
    t = h * (1.0 / 6.0) + 1.0 + hf
    h = t - jnp.floor(t)
    v = maxc
    # Branchless HSV->RGB (equivalent to the 6-way sextant select):
    #   c' in {1, 1-f, 0, 0, f, 1} per sextant -> out = v * (1 - s*(1 - c'))
    h6 = h * 6.0
    rp = jnp.clip(jnp.abs(h6 - 3.0) - 1.0, 0.0, 1.0)
    gp = jnp.clip(2.0 - jnp.abs(h6 - 2.0), 0.0, 1.0)
    bp = jnp.clip(2.0 - jnp.abs(h6 - 4.0), 0.0, 1.0)
    return (v * (1.0 - s * (1.0 - rp)),
            v * (1.0 - s * (1.0 - gp)),
            v * (1.0 - s * (1.0 - bp)))


# ---------------------------------------------------------------------------
# Contrast-mean pre-pass (pure JAX, fused into the same jit as the kernel):
# grayscale mean of the image state right before contrast is applied.
# ---------------------------------------------------------------------------
def _pre_contrast_mean(img_flat, factors, fn_order):
    # img_flat: (N, 3, P) -> (N,) f32
    r, g, b = img_flat[:, 0], img_flat[:, 1], img_flat[:, 2]
    for fn_id in fn_order:
        if fn_id == 1:
            break
        if fn_id == 0:
            r, g, b = _brightness3(r, g, b, factors[0])
        elif fn_id == 2:
            r, g, b = _saturation3(r, g, b, factors[2])
        elif fn_id == 3:
            r, g, b = _hue3(r, g, b, factors[3])
    return jnp.mean(_gray3(r, g, b), axis=-1).astype(jnp.float32)


# ---------------------------------------------------------------------------
# Pallas kernel: one (batch, row-tile) block per grid step.
# Scalar-prefetch args (SMEM): per-image contrast means and the 4 factors.
# ---------------------------------------------------------------------------
def _color_jitter_kernel(fn_order, mean_ref, factors_ref, img_ref, out_ref):
    # mean_ref    : SMEM (N,) f32   pre-contrast grayscale mean per image
    # factors_ref : SMEM (4,) f32   [brightness, contrast, saturation, hue]
    # img_ref     : VMEM (1, 3, R, 128)
    # out_ref     : VMEM (1, 3, R, 128)
    n = pl.program_id(0)
    r = img_ref[0, 0]  # (R, 128) dense vregs
    g = img_ref[0, 1]
    b = img_ref[0, 2]
    for fn_id in fn_order:  # fn_order is a concrete (static) permutation
        if fn_id == 0:
            r, g, b = _brightness3(r, g, b, factors_ref[0])
        elif fn_id == 1:
            r, g, b = _contrast3(r, g, b, factors_ref[1], mean_ref[n])
        elif fn_id == 2:
            r, g, b = _saturation3(r, g, b, factors_ref[2])
        elif fn_id == 3:
            r, g, b = _hue3(r, g, b, factors_ref[3])
    # Write channel planes directly (no jnp.stack relayout).
    out_ref[0, 0] = r
    out_ref[0, 1] = g
    out_ref[0, 2] = b


def _choose_block_rows(rows, n_images, max_rows):
    """Rows of 128 lanes per channel per block: multiple of 8 or full extent."""
    if rows <= 8:
        return rows
    target = min(max_rows, rows)
    if n_images == 1:
        # Split the row axis so both TensorCores (v7x megacore) get work.
        target = min(target, pl.cdiv(rows, 2))
    block_rows = max(8, (target // 8) * 8)
    return rows if block_rows >= rows else block_rows


@functools.lru_cache(maxsize=None)
def _build_color_jitter(fn_order, N, C, H, W, dtype_name, max_rows):
    dtype = jnp.dtype(dtype_name)
    P = H * W
    P_pad = pl.cdiv(P, _LANES) * _LANES
    rows = P_pad // _LANES
    block_rows = _choose_block_rows(rows, N, max_rows)
    n_tiles = pl.cdiv(rows, block_rows)

    kernel = functools.partial(_color_jitter_kernel, fn_order)

    grid_spec = pltpu.PrefetchScalarGridSpec(
        num_scalar_prefetch=2,  # (means, factors) land in SMEM before the grid
        grid=(N, n_tiles),
        in_specs=[pl.BlockSpec((1, C, block_rows, _LANES),
                               lambda n, t, mean, fac: (n, 0, t, 0))],
        out_specs=pl.BlockSpec((1, C, block_rows, _LANES),
                               lambda n, t, mean, fac: (n, 0, t, 0)),
    )

    n_ops = max(len(fn_order), 1)
    cost = pl.CostEstimate(
        flops=int(N * C * P_pad * 30 * n_ops),
        transcendentals=int(N * P_pad * 2) if 3 in fn_order else 0,
        bytes_accessed=int(2 * N * C * P_pad * dtype.itemsize),
    )

    call = pl.pallas_call(
        kernel,
        out_shape=jax.ShapeDtypeStruct((N, C, rows, _LANES), dtype),
        grid_spec=grid_spec,
        compiler_params=pltpu.CompilerParams(
            dimension_semantics=("parallel", "parallel"),
        ),
        cost_estimate=cost,
    )

    def fn(img, factors):
        factors = factors.astype(jnp.float32)
        img_flat = img.reshape(N, C, P)  # contiguous, free reshape
        if 1 in fn_order:
            # Hoisted per-image grayscale mean for adjust_contrast; fused into
            # this same jit so it is not a separate dispatch.
            mean = _pre_contrast_mean(img_flat, factors, fn_order)
        else:
            mean = jnp.zeros((N,), jnp.float32)
        x = img_flat
        if P_pad != P:
            x = jnp.pad(x, ((0, 0), (0, 0), (0, P_pad - P)))
        x = x.reshape(N, C, rows, _LANES)
        out = call(mean, factors, x)
        out = out.reshape(N, C, P_pad)
        if P_pad != P:
            out = out[:, :, :P]
        return out.reshape(N, C, H, W)

    return jax.jit(fn)


def color_jitter_pallas(img, factors, fn_order, *, max_rows=1024):
    """img: (N, 3, H, W) f32 in [0,1]; factors: (4,) f32; fn_order: tuple of ints."""
    N, C, H, W = img.shape
    if C != 3:
        raise ValueError("ColorJitter Pallas kernel expects 3-channel RGB input")
    if img.dtype != jnp.float32:
        raise ValueError("ColorJitter Pallas kernel expects float32 input")
    call = _build_color_jitter(tuple(int(i) for i in fn_order), N, C, H, W,
                               str(img.dtype), int(max_rows))
    return call(img, jnp.asarray(factors, jnp.float32))


# ---------------------------------------------------------------------------
# Module wrapper mirroring torchvision's ColorJitter.
# ---------------------------------------------------------------------------
class ColorJitterPallas:
    def __init__(self, brightness=0, contrast=0, saturation=0, hue=0):
        self.brightness = self._check_input(brightness, "brightness")
        self.contrast = self._check_input(contrast, "contrast")
        self.saturation = self._check_input(saturation, "saturation")
        self.hue = self._check_input(
            hue, "hue", center=0, bound=(-0.5, 0.5), clip_first_on_zero=False
        )

    @staticmethod
    def _check_input(value, name, center=1, bound=(0, float("inf")),
                     clip_first_on_zero=True):
        if isinstance(value, (int, float)):
            if value < 0:
                raise ValueError(f"If {name} is a single number, it must be non negative.")
            value = [center - float(value), center + float(value)]
            if clip_first_on_zero:
                value[0] = max(value[0], 0.0)
        elif isinstance(value, (tuple, list)) and len(value) == 2:
            if not bound[0] <= value[0] <= value[1] <= bound[1]:
                raise ValueError(f"{name} values should be between {bound}")
        else:
            raise TypeError(f"{name} should be a single number or a list/tuple with length 2.")
        if value[0] == value[1] == center:
            value = None
        return value

    def get_params(self, key):
        # Mirrors ColorJitter.get_params; a single device->host sync at the end.
        keys = jax.random.split(key, 5)
        fn_idx = jax.random.permutation(keys[0], 4)
        ranges = [self.brightness, self.contrast, self.saturation, self.hue]
        defaults = [1.0, 1.0, 1.0, 0.0]
        samples = []
        for rng, k, d in zip(ranges, keys[1:], defaults):
            if rng is None:
                samples.append(jnp.full((), d, jnp.float32))
            else:
                samples.append(
                    jax.random.uniform(k, (), jnp.float32, rng[0], rng[1]))
        packed = jnp.concatenate([fn_idx.astype(jnp.float32), jnp.stack(samples)])
        host = np.asarray(packed)  # single device->host sync
        fn_idx_host = host[:4].astype(np.int32)
        factors_host = host[4:].astype(np.float32)
        enabled = {0: self.brightness is not None, 1: self.contrast is not None,
                   2: self.saturation is not None, 3: self.hue is not None}
        # Disabled ops are skipped, exactly as in the PyTorch forward.
        fn_order = tuple(int(i) for i in fn_idx_host if enabled[int(i)])
        return fn_order, factors_host

    def __call__(self, img, key):
        fn_order, factors_host = self.get_params(key)
        factors = jnp.asarray(factors_host, dtype=jnp.float32)
        out = color_jitter_pallas(img, factors, fn_order)
        return out, factors, fn_order


# ---------------------------------------------------------------------------
# Pure-JAX reference (original per-image semantics: contrast mean computed
# in-place), used to verify both the tiling and the hoisted contrast mean.
# ---------------------------------------------------------------------------
def _reference(img, factors, fn_order):
    def per_image(x):  # (3, H, W)
        r, g, b = x[0], x[1], x[2]
        for fn_id in fn_order:
            if fn_id == 0:
                r, g, b = _brightness3(r, g, b, factors[0])
            elif fn_id == 1:
                m = jnp.mean(_gray3(r, g, b))
                r, g, b = _contrast3(r, g, b, factors[1], m)
            elif fn_id == 2:
                r, g, b = _saturation3(r, g, b, factors[2])
            elif fn_id == 3:
                r, g, b = _hue3(r, g, b, factors[3])
        return jnp.stack((r, g, b), axis=0)

    return jax.vmap(per_image)(img)


if __name__ == "__main__":
    key = jax.random.PRNGKey(0)
    k_img, k_params, k_img2 = jax.random.split(key, 3)

    jitter = ColorJitterPallas(brightness=0.4, contrast=0.4, saturation=0.4, hue=0.1)

    # Case 1: N=2, 16x16 (H*W multiple of 128 -> no padding path).
    N, C, H, W = 2, 3, 16, 16
    img = jax.random.uniform(k_img, (N, C, H, W), dtype=jnp.float32)
    out, factors, fn_order = jitter(img, k_params)
    out = jax.block_until_ready(out)
    ref = jax.block_until_ready(_reference(img, factors, fn_order))
    np.testing.assert_allclose(np.asarray(out), np.asarray(ref), atol=1e-5, rtol=1e-5)
    assert out.shape == img.shape and out.dtype == img.dtype

    # Case 2: N=1, 12x12 (H*W not a multiple of 128 -> pad/slice path, N=1 grid).
    img2 = jax.random.uniform(k_img2, (1, 3, 12, 12), dtype=jnp.float32)
    out2 = jax.block_until_ready(color_jitter_pallas(img2, factors, fn_order))
    ref2 = jax.block_until_ready(_reference(img2, factors, fn_order))
    np.testing.assert_allclose(np.asarray(out2), np.asarray(ref2), atol=1e-5, rtol=1e-5)
    assert out2.shape == img2.shape and out2.dtype == img2.dtype

    print("KERNEL_OK")
</pallas_src>

<mosaic_0001>
module attributes {stable_mosaic.version = 11 : i64} {
  func.func @_color_jitter_kernel(%arg0: i32, %arg1: i32, %arg2: memref<2xf32, #tpu.memory_space<smem>>, %arg3: memref<4xf32, #tpu.memory_space<smem>>, %arg4: memref<1x3x2x128xf32, #tpu.memory_space<vmem>>, %arg5: memref<1x3x2x128xf32, #tpu.memory_space<vmem>>) attributes {dimension_semantics = [#tpu.dimension_semantics<parallel>, #tpu.dimension_semantics<parallel>], iteration_bounds = array<i64: 2, 1>, scalar_prefetch = 2 : i64, scratch_operands = 0 : i64, tpu.core_type = #tpu.core_type<tc>, window_params = [{transform_indices = @transform_0, window_bounds = array<i64: 1, 3, 2, 128>}, {transform_indices = @transform_1, window_bounds = array<i64: 1, 3, 2, 128>}]} {
    %c0 = arith.constant 0 : index
    %c0_0 = arith.constant 0 : index
    %c0_1 = arith.constant 0 : index
    %c0_2 = arith.constant 0 : index
    %0 = vector.load %arg4[%c0, %c0_0, %c0_1, %c0_2] : memref<1x3x2x128xf32, #tpu.memory_space<vmem>>, vector<1x1x2x128xf32>
    %1 = vector.shape_cast %0 : vector<1x1x2x128xf32> to vector<2x128xf32>
    %c0_3 = arith.constant 0 : index
    %c1 = arith.constant 1 : index
    %c0_4 = arith.constant 0 : index
    %c0_5 = arith.constant 0 : index
    %2 = vector.load %arg4[%c0_3, %c1, %c0_4, %c0_5] : memref<1x3x2x128xf32, #tpu.memory_space<vmem>>, vector<1x1x2x128xf32>
    %3 = vector.shape_cast %2 : vector<1x1x2x128xf32> to vector<2x128xf32>
    %c0_6 = arith.constant 0 : index
    %c2 = arith.constant 2 : index
    %c0_7 = arith.constant 0 : index
    %c0_8 = arith.constant 0 : index
    %4 = vector.load %arg4[%c0_6, %c2, %c0_7, %c0_8] : memref<1x3x2x128xf32, #tpu.memory_space<vmem>>, vector<1x1x2x128xf32>
    %5 = vector.shape_cast %4 : vector<1x1x2x128xf32> to vector<2x128xf32>
    %c3 = arith.constant 3 : index
    %6 = memref.load %arg3[%c3] : memref<4xf32, #tpu.memory_space<smem>>
    %7 = arith.maximumf %1, %3 : vector<2x128xf32>
    %8 = arith.maximumf %7, %5 : vector<2x128xf32>
    %9 = arith.minimumf %1, %3 : vector<2x128xf32>
    %10 = arith.minimumf %9, %5 : vector<2x128xf32>
    %11 = arith.subf %8, %10 : vector<2x128xf32>
    %cst = arith.constant 0.000000e+00 : f32
    %12 = vector.broadcast %cst : f32 to vector<2x128xf32>
    %13 = arith.cmpf oeq, %11, %12 : vector<2x128xf32>
    %cst_9 = arith.constant 1.000000e+00 : f32
    %14 = vector.broadcast %cst_9 : f32 to vector<2x128xf32>
    %15 = arith.select %13, %14, %11 : vector<2x128xi1>, vector<2x128xf32>
    %cst_10 = arith.constant 1.000000e+00 : f32
    %16 = vector.broadcast %cst_10 : f32 to vector<2x128xf32>
    %17 = arith.divf %16, %15 : vector<2x128xf32>
    %18 = arith.select %13, %14, %8 : vector<2x128xi1>, vector<2x128xf32>
    %cst_11 = arith.constant 1.000000e+00 : f32
    %19 = vector.broadcast %cst_11 : f32 to vector<2x128xf32>
    %20 = arith.divf %19, %18 : vector<2x128xf32>
    %21 = arith.mulf %11, %20 : vector<2x128xf32>
    %22 = arith.subf %8, %1 : vector<2x128xf32>
    %23 = arith.mulf %22, %17 : vector<2x128xf32>
    %24 = arith.subf %8, %3 : vector<2x128xf32>
    %25 = arith.mulf %24, %17 : vector<2x128xf32>
    %26 = arith.subf %8, %5 : vector<2x128xf32>
    %27 = arith.mulf %26, %17 : vector<2x128xf32>
    %28 = arith.cmpf oeq, %8, %1 : vector<2x128xf32>
    %29 = arith.cmpf oeq, %8, %3 : vector<2x128xf32>
    %cst_12 = arith.constant dense<true> : vector<2x128xi1>
    %30 = arith.xori %28, %cst_12 : vector<2x128xi1>
    %31 = arith.andi %29, %30 : vector<2x128xi1>
    %32 = arith.subf %27, %25 : vector<2x128xf32>
    %cst_13 = arith.constant 2.000000e+00 : f32
    %33 = vector.broadcast %cst_13 : f32 to vector<2x128xf32>
    %34 = arith.addf %33, %23 : vector<2x128xf32>
    %35 = arith.subf %34, %27 : vector<2x128xf32>
    %cst_14 = arith.constant 4.000000e+00 : f32
    %36 = vector.broadcast %cst_14 : f32 to vector<2x128xf32>
    %37 = arith.addf %36, %25 : vector<2x128xf32>
    %38 = arith.subf %37, %23 : vector<2x128xf32>
    %39 = arith.select %31, %35, %38 : vector<2x128xi1>, vector<2x128xf32>
    %40 = arith.select %28, %32, %39 : vector<2x128xi1>, vector<2x128xf32>
    %cst_15 = arith.constant 0.166666672 : f32
    %41 = vector.broadcast %cst_15 : f32 to vector<2x128xf32>
    %42 = arith.mulf %40, %41 : vector<2x128xf32>
    %cst_16 = arith.constant 1.000000e+00 : f32
    %43 = vector.broadcast %cst_16 : f32 to vector<2x128xf32>
    %44 = arith.addf %42, %43 : vector<2x128xf32>
    %45 = vector.broadcast %6 : f32 to vector<2x128xf32>
    %46 = arith.addf %44, %45 : vector<2x128xf32>
    %47 = math.floor %46 : vector<2x128xf32>
    %48 = arith.subf %46, %47 : vector<2x128xf32>
    %cst_17 = arith.constant 6.000000e+00 : f32
    %49 = vector.broadcast %cst_17 : f32 to vector<2x128xf32>
    %50 = arith.mulf %48, %49 : vector<2x128xf32>
    %cst_18 = arith.constant 3.000000e+00 : f32
    %51 = vector.broadcast %cst_18 : f32 to vector<2x128xf32>
    %52 = arith.subf %50, %51 : vector<2x128xf32>
    %53 = math.absf %52 : vector<2x128xf32>
    %cst_19 = arith.constant 1.000000e+00 : f32
    %54 = vector.broadcast %cst_19 : f32 to vector<2x128xf32>
    %55 = arith.subf %53, %54 : vector<2x128xf32>
    %cst_20 = arith.constant 0.000000e+00 : f32
    %cst_21 = arith.constant 1.000000e+00 : f32
    %56 = vector.broadcast %cst_20 : f32 to vector<2x128xf32>
    %57 = arith.maximumf %56, %55 : vector<2x128xf32>
    %58 = vector.broadcast %cst_21 : f32 to vector<2x128xf32>
    %59 = arith.minimumf %58, %57 : vector<2x128xf32>
    %cst_22 = arith.constant 2.000000e+00 : f32
    %60 = vector.broadcast %cst_22 : f32 to vector<2x128xf32>
    %61 = arith.subf %50, %60 : vector<2x128xf32>
    %62 = math.absf %61 : vector<2x128xf32>
    %cst_23 = arith.constant 2.000000e+00 : f32
    %63 = vector.broadcast %cst_23 : f32 to vector<2x128xf32>
    %64 = arith.subf %63, %62 : vector<2x128xf32>
    %cst_24 = arith.constant 0.000000e+00 : f32
    %cst_25 = arith.constant 1.000000e+00 : f32
    %65 = vector.broadcast %cst_24 : f32 to vector<2x128xf32>
    %66 = arith.maximumf %65, %64 : vector<2x128xf32>
    %67 = vector.broadcast %cst_25 : f32 to vector<2x128xf32>
    %68 = arith.minimumf %67, %66 : vector<2x128xf32>
    %cst_26 = arith.constant 4.000000e+00 : f32
    %69 = vector.broadcast %cst_26 : f32 to vector<2x128xf32>
    %70 = arith.subf %50, %69 : vector<2x128xf32>
    %71 = math.absf %70 : vector<2x128xf32>
    %cst_27 = arith.constant 2.000000e+00 : f32
    %72 = vector.broadcast %cst_27 : f32 to vector<2x128xf32>
    %73 = arith.subf %72, %71 : vector<2x128xf32>
    %cst_28 = arith.constant 0.000000e+00 : f32
    %cst_29 = arith.constant 1.000000e+00 : f32
    %74 = vector.broadcast %cst_28 : f32 to vector<2x128xf32>
    %75 = arith.maximumf %74, %73 : vector<2x128xf32>
    %76 = vector.broadcast %cst_29 : f32 to vector<2x128xf32>
    %77 = arith.minimumf %76, %75 : vector<2x128xf32>
    %cst_30 = arith.constant 1.000000e+00 : f32
    %78 = vector.broadcast %cst_30 : f32 to vector<2x128xf32>
    %79 = arith.subf %78, %59 : vector<2x128xf32>
    %80 = arith.mulf %21, %79 : vector<2x128xf32>
    %cst_31 = arith.constant 1.000000e+00 : f32
    %81 = vector.broadcast %cst_31 : f32 to vector<2x128xf32>
    %82 = arith.subf %81, %80 : vector<2x128xf32>
    %83 = arith.mulf %8, %82 : vector<2x128xf32>
    %cst_32 = arith.constant 1.000000e+00 : f32
    %84 = vector.broadcast %cst_32 : f32 to vector<2x128xf32>
    %85 = arith.subf %84, %68 : vector<2x128xf32>
    %86 = arith.mulf %21, %85 : vector<2x128xf32>
    %cst_33 = arith.constant 1.000000e+00 : f32
    %87 = vector.broadcast %cst_33 : f32 to vector<2x128xf32>
    %88 = arith.subf %87, %86 : vector<2x128xf32>
    %89 = arith.mulf %8, %88 : vector<2x128xf32>
    %cst_34 = arith.constant 1.000000e+00 : f32
    %90 = vector.broadcast %cst_34 : f32 to vector<2x128xf32>
    %91 = arith.subf %90, %77 : vector<2x128xf32>
    %92 = arith.mulf %21, %91 : vector<2x128xf32>
    %cst_35 = arith.constant 1.000000e+00 : f32
    %93 = vector.broadcast %cst_35 : f32 to vector<2x128xf32>
    %94 = arith.subf %93, %92 : vector<2x128xf32>
    %95 = arith.mulf %8, %94 : vector<2x128xf32>
    %c1_36 = arith.constant 1 : index
    %96 = memref.load %arg3[%c1_36] : memref<4xf32, #tpu.memory_space<smem>>
    %97 = arith.index_cast %arg0 : i32 to index
    %98 = memref.load %arg2[%97] : memref<2xf32, #tpu.memory_space<smem>>
    %cst_37 = arith.constant 1.000000e+00 : f32
    %99 = arith.subf %cst_37, %96 : f32
    %100 = arith.mulf %99, %98 : f32
    %101 = vector.broadcast %96 : f32 to vector<2x128xf32>
    %102 = arith.mulf %101, %83 : vector<2x128xf32>
    %103 = vector.broadcast %100 : f32 to vector<2x128xf32>
    %104 = arith.addf %102, %103 : vector<2x128xf32>
    %cst_38 = arith.constant 0.000000e+00 : f32
    %cst_39 = arith.constant 1.000000e+00 : f32
    %105 = vector.broadcast %cst_38 : f32 to vector<2x128xf32>
    %106 = arith.maximumf %105, %104 : vector<2x128xf32>
    %107 = vector.broadcast %cst_39 : f32 to vector<2x128xf32>
    %108 = arith.minimumf %107, %106 : vector<2x128xf32>
    %109 = vector.broadcast %96 : f32 to vector<2x128xf32>
    %110 = arith.mulf %109, %89 : vector<2x128xf32>
    %111 = vector.broadcast %100 : f32 to vector<2x128xf32>
    %112 = arith.addf %110, %111 : vector<2x128xf32>
    %cst_40 = arith.constant 0.000000e+00 : f32
    %cst_41 = arith.constant 1.000000e+00 : f32
    %113 = vector.broadcast %cst_40 : f32 to vector<2x128xf32>
    %114 = arith.maximumf %113, %112 : vector<2x128xf32>
    %115 = vector.broadcast %cst_41 : f32 to vector<2x128xf32>
    %116 = arith.minimumf %115, %114 : vector<2x128xf32>
    %117 = vector.broadcast %96 : f32 to vector<2x128xf32>
    %118 = arith.mulf %117, %95 : vector<2x128xf32>
    %119 = vector.broadcast %100 : f32 to vector<2x128xf32>
    %120 = arith.addf %118, %119 : vector<2x128xf32>
    %cst_42 = arith.constant 0.000000e+00 : f32
    %cst_43 = arith.constant 1.000000e+00 : f32
    %121 = vector.broadcast %cst_42 : f32 to vector<2x128xf32>
    %122 = arith.maximumf %121, %120 : vector<2x128xf32>
    %123 = vector.broadcast %cst_43 : f32 to vector<2x128xf32>
    %124 = arith.minimumf %123, %122 : vector<2x128xf32>
    %c0_44 = arith.constant 0 : index
    %125 = memref.load %arg3[%c0_44] : memref<4xf32, #tpu.memory_space<smem>>
    %126 = vector.broadcast %125 : f32 to vector<2x128xf32>
    %127 = arith.mulf %108, %126 : vector<2x128xf32>
    %cst_45 = arith.constant 0.000000e+00 : f32
    %cst_46 = arith.constant 1.000000e+00 : f32
    %128 = vector.broadcast %cst_45 : f32 to vector<2x128xf32>
    %129 = arith.maximumf %128, %127 : vector<2x128xf32>
    %130 = vector.broadcast %cst_46 : f32 to vector<2x128xf32>
    %131 = arith.minimumf %130, %129 : vector<2x128xf32>
    %132 = vector.broadcast %125 : f32 to vector<2x128xf32>
    %133 = arith.mulf %116, %132 : vector<2x128xf32>
    %cst_47 = arith.constant 0.000000e+00 : f32
    %cst_48 = arith.constant 1.000000e+00 : f32
    %134 = vector.broadcast %cst_47 : f32 to vector<2x128xf32>
    %135 = arith.maximumf %134, %133 : vector<2x128xf32>
    %136 = vector.broadcast %cst_48 : f32 to vector<2x128xf32>
    %137 = arith.minimumf %136, %135 : vector<2x128xf32>
    %138 = vector.broadcast %125 : f32 to vector<2x128xf32>
    %139 = arith.mulf %124, %138 : vector<2x128xf32>
    %cst_49 = arith.constant 0.000000e+00 : f32
    %cst_50 = arith.constant 1.000000e+00 : f32
    %140 = vector.broadcast %cst_49 : f32 to vector<2x128xf32>
    %141 = arith.maximumf %140, %139 : vector<2x128xf32>
    %142 = vector.broadcast %cst_50 : f32 to vector<2x128xf32>
    %143 = arith.minimumf %142, %141 : vector<2x128xf32>
    %c2_51 = arith.constant 2 : index
    %144 = memref.load %arg3[%c2_51] : memref<4xf32, #tpu.memory_space<smem>>
    %cst_52 = arith.constant 1.000000e+00 : f32
    %145 = arith.subf %cst_52, %144 : f32
    %cst_53 = arith.constant 2.989000e-01 : f32
    %146 = vector.broadcast %cst_53 : f32 to vector<2x128xf32>
    %147 = arith.mulf %146, %131 : vector<2x128xf32>
    %cst_54 = arith.constant 5.870000e-01 : f32
    %148 = vector.broadcast %cst_54 : f32 to vector<2x128xf32>
    %149 = arith.mulf %148, %137 : vector<2x128xf32>
    %150 = arith.addf %147, %149 : vector<2x128xf32>
    %cst_55 = arith.constant 1.140000e-01 : f32
    %151 = vector.broadcast %cst_55 : f32 to vector<2x128xf32>
    %152 = arith.mulf %151, %143 : vector<2x128xf32>
    %153 = arith.addf %150, %152 : vector<2x128xf32>
    %154 = vector.broadcast %145 : f32 to vector<2x128xf32>
    %155 = arith.mulf %154, %153 : vector<2x128xf32>
    %156 = vector.broadcast %144 : f32 to vector<2x128xf32>
    %157 = arith.mulf %156, %131 : vector<2x128xf32>
    %158 = arith.addf %157, %155 : vector<2x128xf32>
    %cst_56 = arith.constant 0.000000e+00 : f32
    %cst_57 = arith.constant 1.000000e+00 : f32
    %159 = vector.broadcast %cst_56 : f32 to vector<2x128xf32>
    %160 = arith.maximumf %159, %158 : vector<2x128xf32>
    %161 = vector.broadcast %cst_57 : f32 to vector<2x128xf32>
    %162 = arith.minimumf %161, %160 : vector<2x128xf32>
    %163 = vector.broadcast %144 : f32 to vector<2x128xf32>
    %164 = arith.mulf %163, %137 : vector<2x128xf32>
    %165 = arith.addf %164, %155 : vector<2x128xf32>
    %cst_58 = arith.constant 0.000000e+00 : f32
    %cst_59 = arith.constant 1.000000e+00 : f32
    %166 = vector.broadcast %cst_58 : f32 to vector<2x128xf32>
    %167 = arith.maximumf %166, %165 : vector<2x128xf32>
    %168 = vector.broadcast %cst_59 : f32 to vector<2x128xf32>
    %169 = arith.minimumf %168, %167 : vector<2x128xf32>
    %170 = vector.broadcast %144 : f32 to vector<2x128xf32>
    %171 = arith.mulf %170, %143 : vector<2x128xf32>
    %172 = arith.addf %171, %155 : vector<2x128xf32>
    %cst_60 = arith.constant 0.000000e+00 : f32
    %cst_61 = arith.constant 1.000000e+00 : f32
    %173 = vector.broadcast %cst_60 : f32 to vector<2x128xf32>
    %174 = arith.maximumf %173, %172 : vector<2x128xf32>
    %175 = vector.broadcast %cst_61 : f32 to vector<2x128xf32>
    %176 = arith.minimumf %175, %174 : vector<2x128xf32>
    %c0_62 = arith.constant 0 : index
    %c0_63 = arith.constant 0 : index
    %c0_64 = arith.constant 0 : index
    %c0_65 = arith.constant 0 : index
    %177 = vector.load %arg5[%c0_62, %c0_63, %c0_64, %c0_65] : memref<1x3x2x128xf32, #tpu.memory_space<vmem>>, vector<1x1x2x128xf32>
    %178 = vector.shape_cast %177 : vector<1x1x2x128xf32> to vector<2x128xf32>
    %179 = vector.shape_cast %162 : vector<2x128xf32> to vector<1x1x2x128xf32>
    tpu.vector_store %arg5[%c0_62, %c0_63, %c0_64, %c0_65], %179 {strides = array<i32>} : memref<1x3x2x128xf32, #tpu.memory_space<vmem>>, vector<1x1x2x128xf32>,
    %c0_66 = arith.constant 0 : index
    %c1_67 = arith.constant 1 : index
    %c0_68 = arith.constant 0 : index
    %c0_69 = arith.constant 0 : index
    %180 = vector.load %arg5[%c0_66, %c1_67, %c0_68, %c0_69] : memref<1x3x2x128xf32, #tpu.memory_space<vmem>>, vector<1x1x2x128xf32>
    %181 = vector.shape_cast %180 : vector<1x1x2x128xf32> to vector<2x128xf32>
    %182 = vector.shape_cast %169 : vector<2x128xf32> to vector<1x1x2x128xf32>
    tpu.vector_store %arg5[%c0_66, %c1_67, %c0_68, %c0_69], %182 {strides = array<i32>} : memref<1x3x2x128xf32, #tpu.memory_space<vmem>>, vector<1x1x2x128xf32>,
    %c0_70 = arith.constant 0 : index
    %c2_71 = arith.constant 2 : index
    %c0_72 = arith.constant 0 : index
    %c0_73 = arith.constant 0 : index
    %183 = vector.load %arg5[%c0_70, %c2_71, %c0_72, %c0_73] : memref<1x3x2x128xf32, #tpu.memory_space<vmem>>, vector<1x1x2x128xf32>
    %184 = vector.shape_cast %183 : vector<1x1x2x128xf32> to vector<2x128xf32>
    %185 = vector.shape_cast %176 : vector<2x128xf32> to vector<1x1x2x128xf32>
    tpu.vector_store %arg5[%c0_70, %c2_71, %c0_72, %c0_73], %185 {strides = array<i32>} : memref<1x3x2x128xf32, #tpu.memory_space<vmem>>, vector<1x1x2x128xf32>,
    return
  }
  func.func @transform_0(%arg0: i32, %arg1: i32, %arg2: memref<2xf32, #tpu.memory_space<smem>>, %arg3: memref<4xf32, #tpu.memory_space<smem>>) -> (i32, i32, i32, i32) {
    %c0_i32 = arith.constant 0 : i32
    %c0_i32_0 = arith.constant 0 : i32
    %c0_i32_1 = arith.constant 0 : i32
    return %arg0, %c0_i32, %arg1, %c0_i32_0 : i32, i32, i32, i32
  }
  func.func @transform_1(%arg0: i32, %arg1: i32, %arg2: memref<2xf32, #tpu.memory_space<smem>>, %arg3: memref<4xf32, #tpu.memory_space<smem>>) -> (i32, i32, i32, i32) {
    %c0_i32 = arith.constant 0 : i32
    %c0_i32_0 = arith.constant 0 : i32
    %c0_i32_1 = arith.constant 0 : i32
    return %arg0, %c0_i32, %arg1, %c0_i32_0 : i32, i32, i32, i32
  }
}

</mosaic_0001>

<llo_original>
// kernel: fn.1
$region0: #{fn.1}
  #allocation0 [shape = 'u32[]', space=smem, size = 0x4, offset = 0x4, fixed_abs, tag = 'smem constant byte address 0x4 - core index']
  #allocation1 [shape = 'u32[144,128]{1,0:T(1,128)}', space=vmem, size = 0x12000, scoped, tag = 'internal scratch']
  #allocation2 [shape = 's32[1]{0}', space=sflag, size = 0x4, scoped, tag = 'scoped memory for fn.1']
  #allocation3 [shape = 'u8[512]{0}', space=smem, size = 0x200, scoped, tag = 'prefetched SMEM operand 0']
  #allocation4 [shape = 'u8[512]{0}', space=smem, size = 0x200, scoped, tag = 'prefetched SMEM operand 1']
  %s0 = inlined_call_operand.vmem [shape: f32[2], index: 0, kind: input, shape index: {}]
  %s1 = inlined_call_operand.vmem [shape: f32[4], index: 1, kind: input, shape index: {}]
  %s2 = inlined_call_operand.vmem [shape: f32[2,3,2,128], index: 2, kind: input, shape index: {}]
  %s3 = inlined_call_operand.vmem [shape: f32[2,3,2,128], index: 3, kind: output, shape index: {}]
  %s4 = sld [smem:[#allocation0]]
  $region37: #{fn.1} parent=0
    _
  %s6 = ssub.s32 1, %s4
  %s7 = scalar_select 0, %s6, %s4
  %s8 = sshll.u32 %s0, 4
  %s9 = int_to_ptr.vmem [resolvable:$true] %s8
  %11 = dma.vmem_to_smem %s9, 16, [#allocation3], [#allocation2]
  %s12 = sshll.u32 %s1, 4
  %s13 = int_to_ptr.vmem [resolvable:$true] %s12
  %15 = dma.vmem_to_smem %s13, 16, [#allocation4], [#allocation2]
  %16 = dma.done [#allocation2], 32
  %17 = sfence
  loop: start=0, step=1, limit=4
  $region2: #{fn.1} parent=0 // loop_pre_header
    _
  $region3: #{fn.1} parent=0 // loop_header
    %s19 = sphi 0, %s23
    %p20 = scmp.ge.s32.totalorder %s19, 4
    %s26 = sphi 0, %s38
    %s27 = sphi 0, %s34
    %s28 = sphi 0, %s26
    %s29 = sphi 0, %s27
    %s30 = sphi 0, %s28
    %s31 = sphi 0, %s29
    %s43 = sphi 0, %s45
    %s46 = sphi 0, %s43
    %s47 = sphi 0, %s46
    %s63 = sphi 0, %s47
    %s71 = sphi 0, %s73
    %s74 = sphi 0, %s71
    %s75 = sphi 0, %s74
    %s91 = sphi 0, %s75
  $region4: #{fn.1} parent=0 // loop_header_branch
    %22 = sbr.rel (%p20) target = $region8
  $region5: #{fn.1} parent=0 // loop_body
    %s24 = ssub.s32 %s19, 1
    %s25 = ssub.s32 %s19, 2
    %s32 = sadd.s32 1, %s27
    %p33 = scmp.ge.s32.totalorder %s32, 1
    %s34 = scalar_select %p33, 0, %s32
    %s35 = sadd.s32 1, %s26
    %s36 = scalar_select %p33, %s35, %s26
    %p37 = scmp.ge.s32.totalorder %s36, 2
    %s38 = scalar_select %p37, 0, %s36
    %s39 = ssub.s32 %s26, %s38
    %s40 = ssub.s32 %s27, %s34
    %s41 = sor.u32 %s39, %s40
    %p42 = scmp.eq.s32.totalorder %s41, 0
    %s44 = sadd.s32 %s43, 1
    %s45 = scalar_select %p42, %s43, %s44
    %p48 = pneg %p42
    %p49 = scmp.eq.s32.totalorder %s19, 1
    %p50 = por %p48, %p49
    %p51 = scmp.ne.s32.totalorder %s43, %s46
    %p52 = scmp.eq.s32.totalorder %s19, 0
    %p53 = por %p51, %p52
    %p54 = scmp.ne.s32.totalorder %s43, %s46
    %p55 = scmp.eq.s32.totalorder %s24, 1
    %p56 = por %p54, %p55
    %p57 = scmp.ne.s32.totalorder %s46, %s47
    %p58 = scmp.eq.s32.totalorder %s24, 0
    %p59 = por %p57, %p58
    %p60 = scmp.ne.s32.totalorder %s46, %s47
    %p61 = scmp.eq.s32.totalorder %s25, 1
    %p62 = por %p60, %p61
    %p64 = scmp.ne.s32.totalorder %s47, %s63
    %p65 = scmp.eq.s32.totalorder %s25, 0
    %p66 = por %p64, %p65
    %s67 = ssub.s32 %s26, %s38
    %s68 = ssub.s32 %s27, %s34
    %s69 = sor.u32 %s67, %s68
    %p70 = scmp.eq.s32.totalorder %s69, 0
    %s72 = sadd.s32 %s71, 1
    %s73 = scalar_select %p70, %s71, %s72
    %p76 = pneg %p70
    %p77 = scmp.eq.s32.totalorder %s19, 1
    %p78 = por %p76, %p77
    %p79 = scmp.ne.s32.totalorder %s71, %s74
    %p80 = scmp.eq.s32.totalorder %s19, 0
    %p81 = por %p79, %p80
    %p82 = scmp.ne.s32.totalorder %s71, %s74
    %p83 = scmp.eq.s32.totalorder %s24, 1
    %p84 = por %p82, %p83
    %p85 = scmp.ne.s32.totalorder %s74, %s75
    %p86 = scmp.eq.s32.totalorder %s24, 0
    %p87 = por %p85, %p86
    %p88 = scmp.ne.s32.totalorder %s74, %s75
    %p89 = scmp.eq.s32.totalorder %s25, 1
    %p90 = por %p88, %p89
    %p92 = scmp.ne.s32.totalorder %s75, %s91
    %p93 = scmp.eq.s32.totalorder %s25, 0
    %p94 = por %p92, %p93
    %p95 = scmp.le.s32.totalorder 1, %s19
    %p96 = scmp.lt.s32.totalorder %s19, 3
    %p97 = pnand %p95, %p96
    %p98 = pneg %p97
    // Predicated region
    $region9: #{fn.1} parent=5 // pred_check
      _
    $region10: #{fn.1} parent=5 // pred_check_branch
      %100 = sbr.rel (%p97) target = $region12
    $region11: #{fn.1} parent=5 // pred_region
      %s101 = ssub.s32 %s19, 1
    $region12: #{fn.1} parent=5 // pred_fallthru
      _
    %p102 = scmp.lt.s32.totalorder %s19, 2
    // Predicated region
    $region13: #{fn.1} parent=5 // pred_check
      %p103 = pneg %p102
    $region14: #{fn.1} parent=5 // pred_check_branch
      %105 = sbr.rel (%p103) target = $region16
    $region15: #{fn.1} parent=5 // pred_region
      // Predicated region
      $region17: #{fn.1} parent=15 // pred_check
        %p106 = pneg %p53
      $region18: #{fn.1} parent=15 // pred_check_branch
        %108 = sbr.rel (%p106) target = $region20
      $region19: #{fn.1} parent=15 // pred_region
        %p109 = scmp.lt.s32.totalorder %s26, 1
        %s110 = scalar_select %p109, %s26, 1
        %p111 = scmp.lt.s32.totalorder %s27, 0
        %s112 = scalar_select %p111, %s27, 0
        %s113 = smul.addr %s110, 3
        %s114 = sadd.s32 %s112, %s113
        %s115 = smul.addr %s114, 2
        %s116 = scalar_lea.vmem %s2, %s115
      $region20: #{fn.1} parent=15 // pred_fallthru
        _
    $region16: #{fn.1} parent=5 // pred_fallthru
      _
    %p117 = scmp.le.s32.totalorder 1, %s19
    %p118 = scmp.lt.s32.totalorder %s19, 3
    %p119 = pnand %p117, %p118
    %p120 = pneg %p119
    // Predicated region
    $region21: #{fn.1} parent=5 // pred_check
      _
    $region22: #{fn.1} parent=5 // pred_check_branch
      %122 = sbr.rel (%p119) target = $region24
    $region23: #{fn.1} parent=5 // pred_region
      %s123 = ssub.s32 %s19, 1
      %p124 = scmp.lt.s32.totalorder %s28, 1
      %s125 = scalar_select %p124, %s28, 1
      %p126 = scmp.lt.s32.totalorder %s29, 0
      %s127 = scalar_select %p126, %s29, 0
      %s128 = smul.addr %s125, 3
      %s129 = sadd.s32 %s127, %s128
      %s130 = smul.addr %s129, 2
      %s131 = scalar_lea.vmem %s2, %s130
      %p132 = pneg %p59
      %p133 = pneg %p56
      %p134 = pneg %p87
      %p135 = pneg %p84
      %p136 = scmp.lt.s32.totalorder %s28, 1
      %s137 = scalar_select %p136, %s28, 1
      %p138 = scmp.lt.s32.totalorder %s29, 0
      %s139 = scalar_select %p138, %s29, 0
      %s140 = smul.addr %s137, 3
      %s141 = sadd.s32 %s139, %s140
      %s142 = smul.addr %s141, 2
      %s143 = scalar_lea.vmem %s3, %s142
      %p144 = scmp.lt.s32.totalorder %s28, 1
      %s145 = scalar_select %p144, %s28, 1
      %p146 = scmp.lt.s32.totalorder %s29, 0
      %s147 = scalar_select %p146, %s29, 0
      %s148 = smul.addr %s145, 3
      %s149 = sadd.s32 %s147, %s148
      %s150 = smul.addr %s149, 2
      %s151 = scalar_lea.vmem %s2, %s150
      %p152 = scmp.lt.s32.totalorder %s28, 1
      %s153 = scalar_select %p152, %s28, 1
      %p154 = scmp.lt.s32.totalorder %s29, 0
      %s155 = scalar_select %p154, %s29, 0
      %s156 = smul.addr %s153, 3
      %s157 = sadd.s32 %s155, %s156
      %s158 = smul.addr %s157, 2
      %s159 = scalar_lea.vmem %s3, %s158
      %v160 = vld [vmem:[%s151] sm:$0x3]
      %s161 = scalar_lea.vmem %s151, 2
      %v162 = vld [vmem:[%s161] sm:$0x3]
      %s163 = scalar_lea.vmem %s151, 4
      %v164 = vld [vmem:[%s163] sm:$0x3]
      %s165 = sld [smem:[#allocation4 + $0x3]]
      %v166 = vmax.f32 %v160, %v162
      %v167 = vmax.f32 %v166, %v164
      %v168 = vmin.f32 %v160, %v162
      %v169 = vmin.f32 %v168, %v164
      %v170 = vsub.f32 %v167, %v169
      %vm171 = vcmp.eq.f32.partialorder %v170, 0.0
      %v172 = vsel %vm171, 1.0, %v170
      %v173 = vrcp.pop %v172
      %v174 = vmul.f32 1.0, %v173
      %v175 = vsel %vm171, 1.0, %v167
      %v176 = vrcp.pop %v175
      %v177 = vmul.f32 1.0, %v176
      %v178 = vmul.f32 %v170, %v177
      %v179 = vsub.f32 %v167, %v160
      %v180 = vmul.f32 %v179, %v174
      %v181 = vsub.f32 %v167, %v162
      %v182 = vmul.f32 %v181, %v174
      %v183 = vsub.f32 %v167, %v164
      %v184 = vmul.f32 %v183, %v174
      %vm185 = vcmp.eq.f32.partialorder %v167, %v160
      %vm186 = vcmp.eq.f32.partialorder %v167, %v162
      %vm187 = vmxor %vm185, 1
      %vm188 = vmand %vm186, %vm187
      %v189 = vsub.f32 %v184, %v182
      %v190 = vadd.f32 %v180, 2.0
      %v191 = vsub.f32 %v190, %v184
      %v192 = vadd.f32 %v182, 4.0
      %v193 = vsub.f32 %v192, %v180
      %v194 = vsel %vm188, %v191, %v193
      %v195 = vsel %vm185, %v189, %v194
      %v196 = vmul.f32 %v195, 0.16666667
      %v197 = vadd.f32 %v196, 1.0
      %v198 = vstv %s165
      %v199 = vadd.f32 %v197, %v198
      %v200 = vfloor.f32 %v199
      %v201 = vsub.f32 %v199, %v200
      %v202 = vmul.f32 %v201, 6.0
      %v203 = vsub.f32 %v202, 3.0
      %v204 = vand.u32 2147483647, %v203
      %v205 = vsub.f32 %v204, 1.0
      %v206 = vmax.f32 %v205, 0.0
      %v207 = vmin.f32 %v206, 1.0
      %v208 = vsub.f32 %v202, 2.0
      %v209 = vand.u32 2147483647, %v208
      %v210 = vsub.f32 2.0, %v209
      %v211 = vmax.f32 %v210, 0.0
      %v212 = vmin.f32 %v211, 1.0
      %v213 = vsub.f32 %v202, 4.0
      %v214 = vand.u32 2147483647, %v213
      %v215 = vsub.f32 2.0, %v214
      %v216 = vmax.f32 %v215, 0.0
      %v217 = vmin.f32 %v216, 1.0
      %v218 = vsub.f32 1.0, %v207
      %v219 = vmul.f32 %v178, %v218
      %v220 = vsub.f32 1.0, %v219
      %v221 = vmul.f32 %v167, %v220
      %v222 = vsub.f32 1.0, %v212
      %v223 = vmul.f32 %v178, %v222
      %v224 = vsub.f32 1.0, %v223
      %v225 = vmul.f32 %v167, %v224
      %v226 = vsub.f32 1.0, %v217
      %v227 = vmul.f32 %v178, %v226
      %v228 = vsub.f32 1.0, %v227
      %v229 = vmul.f32 %v167, %v228
      %s230 = sld [smem:[#allocation4 + $0x1]]
      %s231 = sld [smem:[#allocation3 + %s28]]
      %s232 = ssub.f32 1.0, %s230
      %s233 = smul.f32 %s232, %s231
      %v234 = vstv %s230
      %v235 = vmul.f32 %v234, %v221
      %v236 = vstv %s233
      %v237 = vadd.f32 %v235, %v236
      %v238 = vmax.f32 %v237, 0.0
      %v239 = vmin.f32 %v238, 1.0
      %v240 = vmul.f32 %v234, %v225
      %v241 = vadd.f32 %v240, %v236
      %v242 = vmax.f32 %v241, 0.0
      %v243 = vmin.f32 %v242, 1.0
      %v244 = vmul.f32 %v234, %v229
      %v245 = vadd.f32 %v244, %v236
      %v246 = vmax.f32 %v245, 0.0
      %v247 = vmin.f32 %v246, 1.0
      %s248 = sld [smem:[#allocation4]]
      %v249 = vstv %s248
      %v250 = vmul.f32 %v239, %v249
      %v251 = vmax.f32 %v250, 0.0
      %v252 = vmin.f32 %v251, 1.0
      %v253 = vmul.f32 %v243, %v249
      %v254 = vmax.f32 %v253, 0.0
      %v255 = vmin.f32 %v254, 1.0
      %v256 = vmul.f32 %v247, %v249
      %v257 = vmax.f32 %v256, 0.0
      %v258 = vmin.f32 %v257, 1.0
      %s259 = sld [smem:[#allocation4 + $0x2]]
      %s260 = ssub.f32 1.0, %s259
      %v261 = vmul.f32 %v252, 0.2989
      %v262 = vmul.f32 %v255, 0.587
      %v263 = vadd.f32 %v261, %v262
      %v264 = vmul.f32 %v258, 0.114
      %v265 = vadd.f32 %v263, %v264
      %v266 = vstv %s260
      %v267 = vmul.f32 %v266, %v265
      %v268 = vstv %s259
      %v269 = vmul.f32 %v268, %v252
      %v270 = vadd.f32 %v269, %v267
      %v271 = vmax.f32 %v270, 0.0
      %v272 = vmin.f32 %v271, 1.0
      %v273 = vmul.f32 %v268, %v255
      %v274 = vadd.f32 %v273, %v267
      %v275 = vmax.f32 %v274, 0.0
      %v276 = vmin.f32 %v275, 1.0
      %v277 = vmul.f32 %v268, %v258
      %v278 = vadd.f32 %v277, %v267
      %v279 = vmax.f32 %v278, 0.0
      %v280 = vmin.f32 %v279, 1.0
      %281 = vst [vmem:[%s159] sm:$0x3] %v272
      %s282 = scalar_lea.vmem %s159, 2
      %283 = vst [vmem:[%s282] sm:$0x3] %v276
      %s284 = scalar_lea.vmem %s159, 4
      %285 = vst [vmem:[%s284] sm:$0x3] %v280
      %p286 = scmp.lt.s32.totalorder %s28, 1
      %s287 = scalar_select %p286, %s28, 1
      %p288 = scmp.lt.s32.totalorder %s29, 0
      %s289 = scalar_select %p288, %s29, 0
      %s290 = smul.addr %s287, 3
      %s291 = sadd.s32 %s289, %s290
      %s292 = smul.addr %s291, 2
      %s293 = scalar_lea.vmem %s3, %s292
      // Predicated region
      $region25: #{fn.1} parent=23 // pred_check
        %p294 = pneg %p84
      $region26: #{fn.1} parent=23 // pred_check_branch
        %296 = sbr.rel (%p294) target = $region28
      $region27: #{fn.1} parent=23 // pred_region
        _
      $region28: #{fn.1} parent=23 // pred_fallthru
        _
    $region24: #{fn.1} parent=5 // pred_fallthru
      _
    %p297 = scmp.le.s32.totalorder 2, %s19
    // Predicated region
    $region29: #{fn.1} parent=5 // pred_check
      %p298 = pneg %p297
    $region30: #{fn.1} parent=5 // pred_check_branch
      %300 = sbr.rel (%p298) target = $region32
    $region31: #{fn.1} parent=5 // pred_region
      %s301 = ssub.s32 %s19, 2
      // Predicated region
      $region33: #{fn.1} parent=31 // pred_check
        %p302 = pneg %p90
      $region34: #{fn.1} parent=31 // pred_check_branch
        %304 = sbr.rel (%p302) target = $region36
      $region35: #{fn.1} parent=31 // pred_region
        %p305 = scmp.lt.s32.totalorder %s30, 1
        %s306 = scalar_select %p305, %s30, 1
        %p307 = scmp.lt.s32.totalorder %s31, 0
        %s308 = scalar_select %p307, %s31, 0
        %s309 = smul.addr %s306, 3
        %s310 = sadd.s32 %s308, %s309
        %s311 = smul.addr %s310, 2
        %s312 = scalar_lea.vmem %s3, %s311
      $region36: #{fn.1} parent=31 // pred_fallthru
        _
    $region32: #{fn.1} parent=5 // pred_fallthru
      _
  $region6: #{fn.1} parent=0 // loop_footer
    %s23 = sadd.s32 1, %s19
  $region7: #{fn.1} parent=0 // loop_footer_branch
    %18 = sbr.rel target = $region3
  $region8: #{fn.1} parent=0 // loop_exit
    _

</llo_original>
